<compile_context>
chip_gen: v7x
topology: tpu7x:2x2x1
jax: 0.10.0
libtpu: 0.0.40
codegen_flags: <defaults>
</compile_context>

<pallas_src>
import functools
import math

import jax
import jax.numpy as jnp
from jax import lax
from jax.experimental import pallas as pl
from jax.experimental.pallas import tpu as pltpu

# Module-level hyper-parameters from the training script.
S = 30.0
M = 0.5
EASY_MARGIN = False
LS_EPS = 0.0
NORM_EPS = 1e-12  # F.normalize default: v / max(||v||_2, eps)


def _round_up(x, mult):
    return ((x + mult - 1) // mult) * mult


def _arc_margin_kernel(x_ref, wt_ref, label_ref, out_ref, *,
                       s, cos_m, sin_m, th, mm, easy_margin, ls_eps,
                       out_features, tn, use_bf16):
    # x_ref:     (TM, D)  raw (un-normalized) input rows
    # wt_ref:    (D, TN)  pre-normalized weight, transposed (lane-dense rhs)
    # label_ref: (TM, 1)  int32 class id per row
    # out_ref:   (TM, TN) f32 logits for this (batch tile, class tile)
    x = x_ref[...].astype(jnp.float32)

    # F.normalize(input): x / max(||x||, eps) == x * rsqrt(max(sum(x^2), eps^2)).
    # rsqrt lands on the EUP slot -> essentially free under an MXU-bound loop.
    sumsq = jnp.sum(x * x, axis=-1, keepdims=True)
    x_n = x * lax.rsqrt(jnp.maximum(sumsq, NORM_EPS * NORM_EPS))

    wt = wt_ref[...]
    if use_bf16:
        x_n = x_n.astype(jnp.bfloat16)          # wt already bf16 from the wrapper
    else:
        wt = wt.astype(jnp.float32)

    # cosine = x_n @ w_n.T  (weights normalized + transposed outside the grid)
    cosine = jnp.dot(x_n, wt, preferred_element_type=jnp.float32)   # (TM, TN) f32

    # ArcFace margin: phi = cos(theta + m). Clamp 1 - cos^2 at 0 to avoid NaN
    # from fp overshoot of |cos| > 1 (PyTorch relies on |cos| <= 1 as well).
    sine = jnp.sqrt(jnp.maximum(1.0 - cosine * cosine, 0.0))
    phi = cosine * cos_m - sine * sin_m
    if easy_margin:
        phi = jnp.where(cosine > 0.0, phi, cosine)
    else:
        phi = jnp.where(cosine > th, phi, cosine - mm)

    # One-hot via iota compare against the *global* class index of this tile.
    col = lax.broadcasted_iota(jnp.int32, cosine.shape, 1) + pl.program_id(1) * tn
    is_target = col == label_ref[...]                                # (TM, TN) bool

    if ls_eps > 0.0:
        one_hot = is_target.astype(jnp.float32)
        one_hot = (1.0 - ls_eps) * one_hot + ls_eps / out_features
        out = one_hot * phi + (1.0 - one_hot) * cosine
    else:
        out = jnp.where(is_target, phi, cosine)

    out_ref[...] = (s * out).astype(out_ref.dtype)


def arc_margin_product(x, weight, label, *, s=S, m=M, easy_margin=EASY_MARGIN,
                       ls_eps=LS_EPS, tm=256, tn=1024, use_bf16_matmul=False):
    """x: (B, D) f32, weight: (N, D) f32, label: (B,) int -> (B, N) f32 logits."""
    B, D = x.shape
    N, D2 = weight.shape
    assert D == D2
    out_features = N

    # Hoist weight normalization out of the grid (once per call) and
    # pre-transpose to (D, N) so the MXU rhs / output lane dimension is N.
    w32 = weight.astype(jnp.float32)
    w_n = w32 / jnp.maximum(jnp.linalg.norm(w32, axis=-1, keepdims=True), NORM_EPS)
    wt = w_n.T                                           # (D, N)
    if use_bf16_matmul:
        wt = wt.astype(jnp.bfloat16)

    # Tile selection: TM multiple of 8 (sublanes), TN multiple of 128 (lanes),
    # clamped to the (padded) problem size. Padded rows/cols are sliced off.
    tm = max(8, min(tm, _round_up(B, 8)))
    tn = max(128, min(tn, _round_up(N, 128)))
    Bp = _round_up(B, tm)
    Np = _round_up(N, tn)

    x_p = jnp.pad(x.astype(jnp.float32), ((0, Bp - B), (0, 0))) if Bp != B \
        else x.astype(jnp.float32)
    wt_p = jnp.pad(wt, ((0, 0), (0, Np - N))) if Np != N else wt
    label2d = label.reshape(B, 1).astype(jnp.int32)
    if Bp != B:
        label2d = jnp.pad(label2d, ((0, Bp - B), (0, 0)))

    grid = (Bp // tm, Np // tn)

    kernel = functools.partial(
        _arc_margin_kernel,
        s=float(s),
        cos_m=math.cos(m), sin_m=math.sin(m),
        th=math.cos(math.pi - m), mm=math.sin(math.pi - m) * m,
        easy_margin=easy_margin, ls_eps=float(ls_eps),
        out_features=out_features, tn=tn, use_bf16=use_bf16_matmul)

    wt_itemsize = 2 if use_bf16_matmul else 4
    cost = pl.CostEstimate(
        flops=2 * Bp * Np * D,
        transcendentals=Bp * Np + Bp,                    # sqrt per logit + rsqrt per row
        bytes_accessed=Bp * D * 4 + D * Np * wt_itemsize + Bp * Np * 4 + Bp * 4)

    # Double-buffered tiles (x, wt, label) + out tile, with headroom; keep the
    # limit within v7x's 64 MiB physical VMEM.
    vmem_need = 2 * (tm * D * 4 + D * tn * wt_itemsize + tm * tn * 4 + tm * 4)
    vmem_limit = int(max(min(2 * vmem_need + (4 << 20), 64 << 20), 32 << 20))

    out_p = pl.pallas_call(
        kernel,
        out_shape=jax.ShapeDtypeStruct((Bp, Np), jnp.float32),
        grid_spec=pltpu.PrefetchScalarGridSpec(
            num_scalar_prefetch=0,
            grid=grid,
            in_specs=[
                pl.BlockSpec((tm, D), lambda i, j: (i, 0)),   # activations
                pl.BlockSpec((D, tn), lambda i, j: (0, j)),   # normalized weight^T
                pl.BlockSpec((tm, 1), lambda i, j: (i, 0)),   # labels
            ],
            out_specs=pl.BlockSpec((tm, tn), lambda i, j: (i, j)),
        ),
        compiler_params=pltpu.CompilerParams(
            dimension_semantics=("parallel", "parallel"),
            vmem_limit_bytes=vmem_limit),
        cost_estimate=cost,
    )(x_p, wt_p, label2d)

    return out_p[:B, :N]
    # TODO(synk): for very large D (>~2K) add a K grid axis with a VMEM f32
    # accumulator (pl.when init/finalize) to cap VMEM per tile on v7x.


def xavier_uniform(key, out_features, in_features):
    # nn.init.xavier_uniform_: U(-a, a), a = sqrt(6 / (fan_in + fan_out))
    bound = (6.0 / (in_features + out_features)) ** 0.5
    return jax.random.uniform(
        key, (out_features, in_features), jnp.float32, -bound, bound)


def arc_margin_reference(x, weight, label, *, s=S, m=M,
                         easy_margin=EASY_MARGIN, ls_eps=LS_EPS):
    x_n = x / jnp.maximum(jnp.linalg.norm(x, axis=-1, keepdims=True), NORM_EPS)
    w_n = weight / jnp.maximum(
        jnp.linalg.norm(weight, axis=-1, keepdims=True), NORM_EPS)
    cosine = x_n @ w_n.T
    sine = jnp.sqrt(jnp.maximum(1.0 - cosine ** 2, 0.0))
    phi = cosine * math.cos(m) - sine * math.sin(m)
    if easy_margin:
        phi = jnp.where(cosine > 0.0, phi, cosine)
    else:
        phi = jnp.where(cosine > math.cos(math.pi - m),
                        phi, cosine - math.sin(math.pi - m) * m)
    one_hot = jax.nn.one_hot(label, weight.shape[0], dtype=jnp.float32)
    if ls_eps > 0.0:
        one_hot = (1.0 - ls_eps) * one_hot + ls_eps / weight.shape[0]
    return s * (one_hot * phi + (1.0 - one_hot) * cosine)


if __name__ == "__main__":
    key = jax.random.PRNGKey(0)
    k_x, k_w, k_l, k_x2, k_w2, k_l2 = jax.random.split(key, 6)

    # Small but tiling-exercising shapes: 128-d embeddings, 256 classes.
    B, D, N = 16, 128, 256
    x = jax.random.normal(k_x, (B, D), jnp.float32)
    weight = xavier_uniform(k_w, N, D)
    label = jax.random.randint(k_l, (B,), 0, N, jnp.int32)

    out = arc_margin_product(x, weight, label, tm=8, tn=128)   # grid (2, 2)
    out = jax.block_until_ready(out)
    ref = arc_margin_reference(x, weight, label)
    assert out.shape == (B, N)
    assert jnp.allclose(out, ref, atol=1e-3, rtol=1e-4), (
        f"max abs diff: {jnp.max(jnp.abs(out - ref))}")

    # Ragged shapes exercise the padding path (B, N not tile multiples).
    B2, N2 = 13, 200
    x2 = jax.random.normal(k_x2, (B2, D), jnp.float32)
    w2 = xavier_uniform(k_w2, N2, D)
    label2 = jax.random.randint(k_l2, (B2,), 0, N2, jnp.int32)
    out2 = jax.block_until_ready(
        arc_margin_product(x2, w2, label2, tm=8, tn=128))
    ref2 = arc_margin_reference(x2, w2, label2)
    assert out2.shape == (B2, N2)
    assert jnp.allclose(out2, ref2, atol=1e-3, rtol=1e-4), (
        f"max abs diff: {jnp.max(jnp.abs(out2 - ref2))}")

    print("KERNEL_OK")
</pallas_src>

<mosaic_0001>
module attributes {stable_mosaic.version = 11 : i64} {
  func.func @_arc_margin_kernel(%arg0: i32, %arg1: i32, %arg2: memref<8x128xf32, #tpu.memory_space<vmem>>, %arg3: memref<128x128xf32, #tpu.memory_space<vmem>>, %arg4: memref<8x1xi32, #tpu.memory_space<vmem>>, %arg5: memref<8x128xf32, #tpu.memory_space<vmem>>) attributes {dimension_semantics = [#tpu.dimension_semantics<parallel>, #tpu.dimension_semantics<parallel>], iteration_bounds = array<i64: 2, 2>, scalar_prefetch = 0 : i64, scratch_operands = 0 : i64, tpu.core_type = #tpu.core_type<tc>, window_params = [{transform_indices = @transform_0, window_bounds = array<i64: 8, 128>}, {transform_indices = @transform_1, window_bounds = array<i64: 128, 128>}, {transform_indices = @transform_2, window_bounds = array<i64: 8, 1>}, {transform_indices = @transform_3, window_bounds = array<i64: 8, 128>}]} {
    %c0 = arith.constant 0 : index
    %c0_0 = arith.constant 0 : index
    %0 = vector.load %arg2[%c0, %c0_0] : memref<8x128xf32, #tpu.memory_space<vmem>>, vector<8x128xf32>
    %1 = arith.mulf %0, %0 : vector<8x128xf32>
    %cst = arith.constant dense<0.000000e+00> : vector<8xf32>
    %2 = vector.multi_reduction <add>, %1, %cst [1] : vector<8x128xf32> to vector<8xf32>
    %3 = vector.shape_cast %2 : vector<8xf32> to vector<8x1xf32>
    %cst_1 = arith.constant 1.000000e-24 : f32
    %4 = vector.broadcast %cst_1 : f32 to vector<8x1xf32>
    %5 = arith.maximumf %3, %4 : vector<8x1xf32>
    %6 = math.rsqrt %5 : vector<8x1xf32>
    %7 = vector.broadcast %6 : vector<8x1xf32> to vector<8x128xf32>
    %8 = arith.mulf %0, %7 : vector<8x128xf32>
    %c0_2 = arith.constant 0 : index
    %c0_3 = arith.constant 0 : index
    %9 = vector.load %arg3[%c0_2, %c0_3] : memref<128x128xf32, #tpu.memory_space<vmem>>, vector<128x128xf32>
    %cst_4 = arith.constant dense<0.000000e+00> : vector<8x128xf32>
    %10 = tpu.matmul %8, %9, %cst_4 {dimension_numbers = #tpu.dot_dimension_numbers<[1], [0], [0], [1], [0, 0, 1, 1], [], []>} : vector<8x128xf32>, vector<128x128xf32>, vector<8x128xf32> -> vector<8x128xf32>
    %11 = arith.mulf %10, %10 : vector<8x128xf32>
    %cst_5 = arith.constant 1.000000e+00 : f32
    %12 = vector.broadcast %cst_5 : f32 to vector<8x128xf32>
    %13 = arith.subf %12, %11 : vector<8x128xf32>
    %cst_6 = arith.constant 0.000000e+00 : f32
    %14 = vector.broadcast %cst_6 : f32 to vector<8x128xf32>
    %15 = arith.maximumf %13, %14 : vector<8x128xf32>
    %16 = math.sqrt %15 : vector<8x128xf32>
    %cst_7 = arith.constant 0.87758255 : f32
    %17 = vector.broadcast %cst_7 : f32 to vector<8x128xf32>
    %18 = arith.mulf %10, %17 : vector<8x128xf32>
    %cst_8 = arith.constant 0.47942555 : f32
    %19 = vector.broadcast %cst_8 : f32 to vector<8x128xf32>
    %20 = arith.mulf %16, %19 : vector<8x128xf32>
    %21 = arith.subf %18, %20 : vector<8x128xf32>
    %cst_9 = arith.constant -0.87758255 : f32
    %22 = vector.broadcast %cst_9 : f32 to vector<8x128xf32>
    %23 = arith.cmpf ogt, %10, %22 : vector<8x128xf32>
    %cst_10 = arith.constant 0.239712775 : f32
    %24 = vector.broadcast %cst_10 : f32 to vector<8x128xf32>
    %25 = arith.subf %10, %24 : vector<8x128xf32>
    %26 = arith.select %23, %21, %25 : vector<8x128xi1>, vector<8x128xf32>
    %27 = tpu.iota {dimensions = array<i32: 1>} : vector<8x128xi32>
    %c128_i32 = arith.constant 128 : i32
    %28 = arith.muli %arg1, %c128_i32 : i32
    %29 = vector.broadcast %28 : i32 to vector<8x128xi32>
    %30 = arith.addi %27, %29 : vector<8x128xi32>
    %c0_11 = arith.constant 0 : index
    %c0_12 = arith.constant 0 : index
    %31 = vector.load %arg4[%c0_11, %c0_12] : memref<8x1xi32, #tpu.memory_space<vmem>>, vector<8x1xi32>
    %32 = vector.broadcast %31 : vector<8x1xi32> to vector<8x128xi32>
    %33 = arith.cmpi eq, %30, %32 : vector<8x128xi32>
    %34 = arith.select %33, %26, %10 : vector<8x128xi1>, vector<8x128xf32>
    %cst_13 = arith.constant 3.000000e+01 : f32
    %35 = vector.broadcast %cst_13 : f32 to vector<8x128xf32>
    %36 = arith.mulf %35, %34 : vector<8x128xf32>
    %c0_14 = arith.constant 0 : index
    %c0_15 = arith.constant 0 : index
    %37 = vector.load %arg5[%c0_14, %c0_15] : memref<8x128xf32, #tpu.memory_space<vmem>>, vector<8x128xf32>
    tpu.vector_store %arg5[%c0_14, %c0_15], %36 {strides = array<i32>} : memref<8x128xf32, #tpu.memory_space<vmem>>, vector<8x128xf32>,
    return
  }
  func.func @transform_0(%arg0: i32, %arg1: i32) -> (i32, i32) {
    %c0_i32 = arith.constant 0 : i32
    %c0_i32_0 = arith.constant 0 : i32
    return %arg0, %c0_i32 : i32, i32
  }
  func.func @transform_1(%arg0: i32, %arg1: i32) -> (i32, i32) {
    %c0_i32 = arith.constant 0 : i32
    %c0_i32_0 = arith.constant 0 : i32
    return %c0_i32, %arg1 : i32, i32
  }
  func.func @transform_2(%arg0: i32, %arg1: i32) -> (i32, i32) {
    %c0_i32 = arith.constant 0 : i32
    %c0_i32_0 = arith.constant 0 : i32
    return %arg0, %c0_i32 : i32, i32
  }
  func.func @transform_3(%arg0: i32, %arg1: i32) -> (i32, i32) {
    %c0_i32 = arith.constant 0 : i32
    return %arg0, %arg1 : i32, i32
  }
}

</mosaic_0001>

<llo_original>
// kernel: tpu_custom_call.1
$region0: #{tpu_custom_call.1}
  #allocation0 [shape = 'u32[]', space=smem, size = 0x4, offset = 0x4, fixed_abs, tag = 'smem constant byte address 0x4 - core index']
  #allocation1 [shape = 'u32[144,128]{1,0:T(1,128)}', space=vmem, size = 0x12000, scoped, tag = 'internal scratch']
  %s0 = inlined_call_operand.vmem [shape: f32[16,128], index: 0, kind: input, shape index: {}]
  %s1 = inlined_call_operand.hbm [shape: f32[128,256], index: 1, kind: input, shape index: {}]
  %s2 = inlined_call_operand.vmem [shape: s32[16,1], index: 2, kind: input, shape index: {}]
  %s3 = inlined_call_operand.hbm [shape: f32[16,256], index: 3, kind: output, shape index: {}]
  %s4 = sld [smem:[#allocation0]]
  $region49: #{tpu_custom_call.1} parent=0
    _
  %s6 = ssub.s32 1, %s4
  %s7 = scalar_select 0, %s6, %s4
  $region1: #{tpu_custom_call.1} parent=0
    #allocation2 [shape = 'u8[131072]{0}', space=vmem, size = 0x20000, scoped, tag = 'input window, operand 1']
    #allocation3 [shape = 's32[2]{0}', space=sflag, size = 0x8, scoped, tag = 'scoped memory for tpu_custom_call.1']
    #allocation4 [shape = 's32[2]{0}', space=sflag, size = 0x8, scoped, tag = 'scoped memory for tpu_custom_call.1']
    #allocation5 [shape = 'u8[8192]{0}', space=vmem, size = 0x2000, scoped, tag = 'output window, operand 0']
    %8 = vsyncpa [#allocation3], 0
    %s9 = scalar_lea.sflag [#allocation3], 1
    %10 = vsyncpa %s9, 0
    %11 = vsyncpa [#allocation4], 0
    %s12 = scalar_lea.sflag [#allocation4], 1
    %13 = vsyncpa %s12, 0
    loop: start=0, step=1, limit=6
    $region2: #{tpu_custom_call.1} parent=1 // loop_pre_header
      _
    $region3: #{tpu_custom_call.1} parent=1 // loop_header
      %s15 = sphi 0, %s19
      %p16 = scmp.ge.s32.totalorder %s15, 6
      %s22 = sphi 0, %s34
      %s23 = sphi 0, %s30
      %s24 = sphi 0, %s22
      %s25 = sphi 0, %s23
      %s26 = sphi 0, %s24
      %s27 = sphi 0, %s25
      %s37 = sphi 0, %s39
      %s40 = sphi 0, %s37
      %s41 = sphi 0, %s40
      %s57 = sphi 0, %s41
      %s63 = sphi 0, %s65
      %s66 = sphi 0, %s63
      %s67 = sphi 0, %s66
      %s83 = sphi 0, %s67
      %s89 = sphi 0, %s91
      %s92 = sphi 0, %s89
      %s93 = sphi 0, %s92
      %s109 = sphi 0, %s93
      %s117 = sphi 0, %s119
      %s120 = sphi 0, %s117
      %s121 = sphi 0, %s120
      %s137 = sphi 0, %s121
    $region4: #{tpu_custom_call.1} parent=1 // loop_header_branch
      %18 = sbr.rel (%p16) target = $region8
    $region5: #{tpu_custom_call.1} parent=1 // loop_body
      %s20 = ssub.s32 %s15, 1
      %s21 = ssub.s32 %s15, 2
      %s28 = sadd.s32 1, %s23
      %p29 = scmp.ge.s32.totalorder %s28, 2
      %s30 = scalar_select %p29, 0, %s28
      %s31 = sadd.s32 1, %s22
      %s32 = scalar_select %p29, %s31, %s22
      %p33 = scmp.ge.s32.totalorder %s32, 2
      %s34 = scalar_select %p33, 0, %s32
      %s35 = ssub.s32 %s22, %s34
      %p36 = scmp.eq.s32.totalorder %s35, 0
      %s38 = sadd.s32 %s37, 1
      %s39 = scalar_select %p36, %s37, %s38
      %p42 = pneg %p36
      %p43 = scmp.eq.s32.totalorder %s15, 3
      %p44 = por %p42, %p43
      %p45 = scmp.ne.s32.totalorder %s37, %s40
      %p46 = scmp.eq.s32.totalorder %s15, 0
      %p47 = por %p45, %p46
      %p48 = scmp.ne.s32.totalorder %s37, %s40
      %p49 = scmp.eq.s32.totalorder %s20, 3
      %p50 = por %p48, %p49
      %p51 = scmp.ne.s32.totalorder %s40, %s41
      %p52 = scmp.eq.s32.totalorder %s20, 0
      %p53 = por %p51, %p52
      %p54 = scmp.ne.s32.totalorder %s40, %s41
      %p55 = scmp.eq.s32.totalorder %s21, 3
      %p56 = por %p54, %p55
      %p58 = scmp.ne.s32.totalorder %s41, %s57
      %p59 = scmp.eq.s32.totalorder %s21, 0
      %p60 = por %p58, %p59
      %s61 = ssub.s32 %s23, %s30
      %p62 = scmp.eq.s32.totalorder %s61, 0
      %s64 = sadd.s32 %s63, 1
      %s65 = scalar_select %p62, %s63, %s64
      %p68 = pneg %p62
      %p69 = scmp.eq.s32.totalorder %s15, 3
      %p70 = por %p68, %p69
      %p71 = scmp.ne.s32.totalorder %s63, %s66
      %p72 = scmp.eq.s32.totalorder %s15, 0
      %p73 = por %p71, %p72
      %p74 = scmp.ne.s32.totalorder %s63, %s66
      %p75 = scmp.eq.s32.totalorder %s20, 3
      %p76 = por %p74, %p75
      %p77 = scmp.ne.s32.totalorder %s66, %s67
      %p78 = scmp.eq.s32.totalorder %s20, 0
      %p79 = por %p77, %p78
      %p80 = scmp.ne.s32.totalorder %s66, %s67
      %p81 = scmp.eq.s32.totalorder %s21, 3
      %p82 = por %p80, %p81
      %p84 = scmp.ne.s32.totalorder %s67, %s83
      %p85 = scmp.eq.s32.totalorder %s21, 0
      %p86 = por %p84, %p85
      %s87 = ssub.s32 %s22, %s34
      %p88 = scmp.eq.s32.totalorder %s87, 0
      %s90 = sadd.s32 %s89, 1
      %s91 = scalar_select %p88, %s89, %s90
      %p94 = pneg %p88
      %p95 = scmp.eq.s32.totalorder %s15, 3
      %p96 = por %p94, %p95
      %p97 = scmp.ne.s32.totalorder %s89, %s92
      %p98 = scmp.eq.s32.totalorder %s15, 0
      %p99 = por %p97, %p98
      %p100 = scmp.ne.s32.totalorder %s89, %s92
      %p101 = scmp.eq.s32.totalorder %s20, 3
      %p102 = por %p100, %p101
      %p103 = scmp.ne.s32.totalorder %s92, %s93
      %p104 = scmp.eq.s32.totalorder %s20, 0
      %p105 = por %p103, %p104
      %p106 = scmp.ne.s32.totalorder %s92, %s93
      %p107 = scmp.eq.s32.totalorder %s21, 3
      %p108 = por %p106, %p107
      %p110 = scmp.ne.s32.totalorder %s93, %s109
      %p111 = scmp.eq.s32.totalorder %s21, 0
      %p112 = por %p110, %p111
      %s113 = ssub.s32 %s22, %s34
      %s114 = ssub.s32 %s23, %s30
      %s115 = sor.u32 %s113, %s114
      %p116 = scmp.eq.s32.totalorder %s115, 0
      %s118 = sadd.s32 %s117, 1
      %s119 = scalar_select %p116, %s117, %s118
      %p122 = pneg %p116
      %p123 = scmp.eq.s32.totalorder %s15, 3
      %p124 = por %p122, %p123
      %p125 = scmp.ne.s32.totalorder %s117, %s120
      %p126 = scmp.eq.s32.totalorder %s15, 0
      %p127 = por %p125, %p126
      %p128 = scmp.ne.s32.totalorder %s117, %s120
      %p129 = scmp.eq.s32.totalorder %s20, 3
      %p130 = por %p128, %p129
      %p131 = scmp.ne.s32.totalorder %s120, %s121
      %p132 = scmp.eq.s32.totalorder %s20, 0
      %p133 = por %p131, %p132
      %p134 = scmp.ne.s32.totalorder %s120, %s121
      %p135 = scmp.eq.s32.totalorder %s21, 3
      %p136 = por %p134, %p135
      %p138 = scmp.ne.s32.totalorder %s121, %s137
      %p139 = scmp.eq.s32.totalorder %s21, 0
      %p140 = por %p138, %p139
      %p141 = scmp.le.s32.totalorder 1, %s15
      %p142 = scmp.lt.s32.totalorder %s15, 5
      %p143 = pnand %p141, %p142
      %p144 = pneg %p143
      // Predicated region
      $region9: #{tpu_custom_call.1} parent=5 // pred_check
        _
      $region10: #{tpu_custom_call.1} parent=5 // pred_check_branch
        %146 = sbr.rel (%p143) target = $region12
      $region11: #{tpu_custom_call.1} parent=5 // pred_region
        %s147 = ssub.s32 %s15, 1
      $region12: #{tpu_custom_call.1} parent=5 // pred_fallthru
        _
      %p148 = scmp.lt.s32.totalorder %s15, 4
      // Predicated region
      $region13: #{tpu_custom_call.1} parent=5 // pred_check
        %p149 = pneg %p148
      $region14: #{tpu_custom_call.1} parent=5 // pred_check_branch
        %151 = sbr.rel (%p149) target = $region16
      $region15: #{tpu_custom_call.1} parent=5 // pred_region
        // Predicated region
        $region17: #{tpu_custom_call.1} parent=15 // pred_check
          %p152 = pneg %p47
        $region18: #{tpu_custom_call.1} parent=15 // pred_check_branch
          %154 = sbr.rel (%p152) target = $region20
        $region19: #{tpu_custom_call.1} parent=15 // pred_region
          %p155 = scmp.lt.s32.totalorder %s22, 1
          %s156 = scalar_select %p155, %s22, 1
          %s157 = smul.addr %s156, 8
          %s158 = scalar_lea.vmem %s0, %s157
        $region20: #{tpu_custom_call.1} parent=15 // pred_fallthru
          _
        // Predicated region
        $region21: #{tpu_custom_call.1} parent=15 // pred_check
          %p159 = pneg %p73
        $region22: #{tpu_custom_call.1} parent=15 // pred_check_branch
          %161 = sbr.rel (%p159) target = $region24
        $region23: #{tpu_custom_call.1} parent=15 // pred_region
          %s162 = sand.u32 %s63, 1
          %s163 = scalar_lea.sflag [#allocation3], %s162
          %s164 = sand.u32 %s63, 1
          %s165 = smul.addr %s164, 128
          %s166 = scalar_lea.vmem [#allocation2], %s165
          %s168 = ssub.s32 2048, 2048
          %169 = vsyncadd %s163, %s168
          %s170 = smul.addr %s23, 128
          %s171 = scalar_lea.hbm %s1, %s170
          %s172 = sshll.u32 %s166, 4
          %s173 = int_to_ptr.vmem [resolvable:$true] %s172
          %178 = dma.hbm_to_vmem [thread:$0]  %s171, 2048, %s173, %s163, 256, 128, 8
        $region24: #{tpu_custom_call.1} parent=15 // pred_fallthru
          _
        // Predicated region
        $region25: #{tpu_custom_call.1} parent=15 // pred_check
          %p179 = pneg %p99
        $region26: #{tpu_custom_call.1} parent=15 // pred_check_branch
          %181 = sbr.rel (%p179) target = $region28
        $region27: #{tpu_custom_call.1} parent=15 // pred_region
          %p182 = scmp.lt.s32.totalorder %s22, 1
          %s183 = scalar_select %p182, %s22, 1
          %s184 = smul.addr %s183, 8
          %s185 = scalar_lea.vmem %s2, %s184
        $region28: #{tpu_custom_call.1} parent=15 // pred_fallthru
          _
      $region16: #{tpu_custom_call.1} parent=5 // pred_fallthru
        _
      %p186 = scmp.le.s32.totalorder 1, %s15
      %p187 = scmp.lt.s32.totalorder %s15, 5
      %p188 = pnand %p186, %p187
      %p189 = pneg %p188
      // Predicated region
      $region29: #{tpu_custom_call.1} parent=5 // pred_check
        _
      $region30: #{tpu_custom_call.1} parent=5 // pred_check_branch
        %191 = sbr.rel (%p188) target = $region32
      $region31: #{tpu_custom_call.1} parent=5 // pred_region
        %s192 = ssub.s32 %s15, 1
        %s193 = sand.u32 %s66, 1
        %s194 = scalar_lea.sflag [#allocation3], %s193
        %s195 = sand.u32 %s66, 1
        %s196 = smul.addr %s195, 128
        %s197 = scalar_lea.vmem [#allocation2], %s196
        // Predicated region
        $region33: #{tpu_custom_call.1} parent=31 // pred_check
          %p198 = pneg %p79
        $region34: #{tpu_custom_call.1} parent=31 // pred_check_branch
          %200 = sbr.rel (%p198) target = $region36
        $region35: #{tpu_custom_call.1} parent=31 // pred_region
          %201 = dma.done %s194, 2048
        $region36: #{tpu_custom_call.1} parent=31 // pred_fallthru
          _
        %p202 = scmp.lt.s32.totalorder %s24, 1
        %s203 = scalar_select %p202, %s24, 1
        %s204 = smul.addr %s203, 8
        %s205 = scalar_lea.vmem %s0, %s204
        %p206 = pneg %p53
        %p207 = pneg %p50
        %s208 = sand.u32 %s66, 1
        %s209 = scalar_lea.sflag [#allocation3], %s208
        %s210 = sand.u32 %s66, 1
        %s211 = smul.addr %s210, 128
        %s212 = scalar_lea.vmem [#allocation2], %s211
        %p213 = pneg %p79
        %p214 = pneg %p76
        %p215 = scmp.lt.s32.totalorder %s24, 1
        %s216 = scalar_select %p215, %s24, 1
        %s217 = smul.addr %s216, 8
        %s218 = scalar_lea.vmem %s2, %s217
        %p219 = pneg %p105
        %p220 = pneg %p102
        %p221 = pneg %p133
        %p222 = pneg %p130
        %s223 = sand.u32 %s120, 1
        %s224 = scalar_lea.sflag [#allocation4], %s223
        %s225 = sand.u32 %s120, 1
        %s226 = smul.addr %s225, 8
        %s227 = scalar_lea.vmem [#allocation5], %s226
        %p228 = scmp.lt.s32.totalorder %s24, 1
        %s229 = scalar_select %p228, %s24, 1
        %s230 = smul.addr %s229, 8
        %s231 = scalar_lea.vmem %s0, %s230
        %p232 = scmp.lt.s32.totalorder %s24, 1
        %s233 = scalar_select %p232, %s24, 1
        %s234 = smul.addr %s233, 8
        %s235 = scalar_lea.vmem %s2, %s234
        %v236 = vld [vmem:[%s231] sm:$0xff]
        %v237 = vmul.f32 %v236, %v236
        %238 = vadd.xlane.f32.xlu0 %v237
        %v239 = vpop.xlane.xlu0 %238
        %v240 = vmax.f32 %v239, 1e-24
        %v241 = vrsqrt.pop %v240
        %v242 = vmul.f32 %v236, %v241
        %v243 = vld [vmem:[%s197] sm:$0xff]
        %v244 = vld [vmem:[%s197 + $0x8] sm:$0xff]
        %v245 = vld [vmem:[%s197 + $0x10] sm:$0xff]
        %v246 = vld [vmem:[%s197 + $0x18] sm:$0xff]
        %v247 = vld [vmem:[%s197 + $0x20] sm:$0xff]
        %v248 = vld [vmem:[%s197 + $0x28] sm:$0xff]
        %v249 = vld [vmem:[%s197 + $0x30] sm:$0xff]
        %v250 = vld [vmem:[%s197 + $0x38] sm:$0xff]
        %v251 = vld [vmem:[%s197 + $0x40] sm:$0xff]
        %v252 = vld [vmem:[%s197 + $0x48] sm:$0xff]
        %v253 = vld [vmem:[%s197 + $0x50] sm:$0xff]
        %v254 = vld [vmem:[%s197 + $0x58] sm:$0xff]
        %v255 = vld [vmem:[%s197 + $0x60] sm:$0xff]
        %v256 = vld [vmem:[%s197 + $0x68] sm:$0xff]
        %v257 = vld [vmem:[%s197 + $0x70] sm:$0xff]
        %v258 = vld [vmem:[%s197 + $0x78] sm:$0xff]
        %259 = vmatprep.subr.mxu0 0.0
        %260 = vmatpush1.msra.mxu0 %v243
        %261 = vmatprep.subr.mxu0 0.0
        %262 = vmatpush1.msra.mxu0 %v244
        %263 = vmatprep.subr.mxu0 0.0
        %264 = vmatpush1.msra.mxu0 %v245
        %265 = vmatprep.subr.mxu0 0.0
        %266 = vmatpush1.msra.mxu0 %v246
        %267 = vmatprep.subr.mxu0 0.0
        %268 = vmatpush1.msra.mxu0 %v247
        %269 = vmatprep.subr.mxu0 0.0
        %270 = vmatpush1.msra.mxu0 %v248
        %271 = vmatprep.subr.mxu0 0.0
        %272 = vmatpush1.msra.mxu0 %v249
        %273 = vmatprep.subr.mxu0 0.0
        %274 = vmatpush1.msra.mxu0 %v250
        %275 = vmatprep.subr.mxu0 0.0
        %276 = vmatpush1.msra.mxu0 %v251
        %277 = vmatprep.subr.mxu0 0.0
        %278 = vmatpush1.msra.mxu0 %v252
        %279 = vmatprep.subr.mxu0 0.0
        %280 = vmatpush1.msra.mxu0 %v253
        %281 = vmatprep.subr.mxu0 0.0
        %282 = vmatpush1.msra.mxu0 %v254
        %283 = vmatprep.subr.mxu0 0.0
        %284 = vmatpush1.msra.mxu0 %v255
        %285 = vmatprep.subr.mxu0 0.0
        %286 = vmatpush1.msra.mxu0 %v256
        %287 = vmatprep.subr.mxu0 0.0
        %288 = vmatpush1.msra.mxu0 %v257
        %289 = vmatprep.subr.mxu0 0.0
        %290 = vmatpush1.msra.mxu0 %v258
        %291 = vmatprep.subr.mxu0 0.0
        %292 = vmatpush1.msra.mxu0 0.0
        %293 = vmatprep.subr.mxu0 0.0
        %294 = vmatpush1.msra.mxu0 0.0
        %295 = vmatprep.subr.mxu0 0.0
        %296 = vmatpush1.msra.mxu0 0.0
        %297 = vmatprep.subr.mxu0 0.0
        %298 = vmatpush1.msra.mxu0 0.0
        %299 = vmatprep.subr.mxu0 0.0
        %300 = vmatpush1.msra.mxu0 0.0
        %301 = vmatprep.subr.mxu0 0.0
        %302 = vmatpush1.msra.mxu0 0.0
        %303 = vmatprep.subr.mxu0 0.0
        %304 = vmatpush1.msra.mxu0 0.0
        %305 = vmatprep.subr.mxu0 0.0
        %306 = vmatpush1.msra.mxu0 0.0
        %307 = vmatprep.subr.mxu0 0.0
        %308 = vmatpush1.msra.mxu0 0.0
        %309 = vmatprep.subr.mxu0 0.0
        %310 = vmatpush1.msra.mxu0 0.0
        %311 = vmatprep.subr.mxu0 0.0
        %312 = vmatpush1.msra.mxu0 0.0
        %313 = vmatprep.subr.mxu0 0.0
        %314 = vmatpush1.msra.mxu0 0.0
        %315 = vmatprep.subr.mxu0 0.0
        %316 = vmatpush1.msra.mxu0 0.0
        %317 = vmatprep.subr.mxu0 0.0
        %318 = vmatpush1.msra.mxu0 0.0
        %319 = vmatprep.subr.mxu0 0.0
        %320 = vmatpush1.msra.mxu0 0.0
        %321 = vmatprep.subr.mxu0 0.0
        %322 = vmatpush1.msra.mxu0 0.0
        %323 = vmatprep.mubr.f32.mxu0 0.0
        %324 = vmatmul.mubr.f32.gmra.mrb[0].mxu0 %v242
        %v325 = vpop.f32.mrb[0].mxu0
        %v326 = vadd.f32 0.0, %v325
        %v327 = vpop.f32.mrb[0].mxu0
        %328 = vdwg.mxu0
        %v329 = vmul.f32 %v326, %v326
        %v330 = vsub.f32 1.0, %v329
        %v331 = vmax.f32 %v330, 0.0
        %v332 = vrsqrt.pop %v331
        %v333 = vmul.f32 %v331, %v332
        %vm334 = vcmp.eq.f32.partialorder %v331, inf
        %v335 = vsel %vm334, %v331, %v333
        %vm336 = vcmp.eq.f32.partialorder %v331, 0.0
        %v337 = vand.u32 %v331, 2147483648
        %v338 = vsel %vm336, %v337, %v335
        %v339 = vmul.f32 %v326, 0.87758255
        %v340 = vmul.f32 %v338, 0.47942555
        %v341 = vsub.f32 %v339, %v340
        %vm342 = vcmp.gt.f32.partialorder %v326, -0.87758255
        %v343 = vsub.f32 %v326, 0.23971277
        %v344 = vsel %vm342, %v341, %v343
        %v345 = vlaneseq
        %v346 = vand.u32 %v345, 127
        %s347 = smul.u32 %s25, 128
        %v348 = vstv %s347
        %v349 = vadd.s32 %v346, %v348
        %v350 = vld [vmem:[%s235] sm:$0xff]
        %351 = vset.pattern.permute.xlu0 0
        %352 = vperm.xlu0 %351, %v350
        %v353 = vpop.permute.xlu0 %352
        %vm354 = vcmp.eq.s32.totalorder %v349, %v353
        %v355 = vsel %vm354, %v344, %v326
        %v356 = vmul.f32 %v355, 30.0
        %357 = vst [vmem:[%s227] sm:$0xff] %v356
        %s358 = sand.u32 %s120, 1
        %s359 = scalar_lea.sflag [#allocation4], %s358
        %s360 = sand.u32 %s120, 1
        %s361 = smul.addr %s360, 8
        %s362 = scalar_lea.vmem [#allocation5], %s361
        // Predicated region
        $region37: #{tpu_custom_call.1} parent=31 // pred_check
          %p363 = pneg %p130
        $region38: #{tpu_custom_call.1} parent=31 // pred_check_branch
          %365 = sbr.rel (%p363) target = $region40
        $region39: #{tpu_custom_call.1} parent=31 // pred_region
          %s367 = ssub.s32 128, 128
          %368 = vsyncadd %s359, %s367
          %s369 = smul.addr %s24, 2
          %s370 = sadd.s32 %s25, %s369
          %s371 = smul.addr %s370, 128
          %s372 = scalar_lea.hbm %s3, %s371
          %s374 = sshll.u32 %s362, 4
          %s375 = int_to_ptr.vmem [resolvable:$true] %s374
          %377 = dma.vmem_to_hbm [thread:$0]  %s375, 128, %s372, %s359
        $region40: #{tpu_custom_call.1} parent=31 // pred_fallthru
          _
      $region32: #{tpu_custom_call.1} parent=5 // pred_fallthru
        _
      %p378 = scmp.le.s32.totalorder 2, %s15
      // Predicated region
      $region41: #{tpu_custom_call.1} parent=5 // pred_check
        %p379 = pneg %p378
      $region42: #{tpu_custom_call.1} parent=5 // pred_check_branch
        %381 = sbr.rel (%p379) target = $region44
      $region43: #{tpu_custom_call.1} parent=5 // pred_region
        %s382 = ssub.s32 %s15, 2
        // Predicated region
        $region45: #{tpu_custom_call.1} parent=43 // pred_check
          %p383 = pneg %p136
        $region46: #{tpu_custom_call.1} parent=43 // pred_check_branch
          %385 = sbr.rel (%p383) target = $region48
        $region47: #{tpu_custom_call.1} parent=43 // pred_region
          %s386 = sand.u32 %s121, 1
          %s387 = scalar_lea.sflag [#allocation4], %s386
          %s388 = sand.u32 %s121, 1
          %s389 = smul.addr %s388, 8
          %s390 = scalar_lea.vmem [#allocation5], %s389
          %391 = dma.done %s387, 128
        $region48: #{tpu_custom_call.1} parent=43 // pred_fallthru
          _
      $region44: #{tpu_custom_call.1} parent=5 // pred_fallthru
        _
    $region6: #{tpu_custom_call.1} parent=1 // loop_footer
      %s19 = sadd.s32 1, %s15
    $region7: #{tpu_custom_call.1} parent=1 // loop_footer_branch
      %14 = sbr.rel target = $region3
    $region8: #{tpu_custom_call.1} parent=1 // loop_exit
      _
    %392 = vsyncpa [#allocation3], 1
    %s393 = scalar_lea.sflag [#allocation3], 1
    %394 = vsyncpa %s393, 1
    %395 = vsyncpa [#allocation4], 1
    %s396 = scalar_lea.sflag [#allocation4], 1
    %397 = vsyncpa %s396, 1

</llo_original>
